<compile_context>
chip_gen: v7x
topology: tpu7x:2x2x1
jax: 0.10.0
libtpu: 0.0.40
codegen_flags: <defaults>
</compile_context>

<pallas_src>
import jax
import jax.numpy as jnp
from jax.experimental import pallas as pl
from jax.experimental.pallas import tpu as pltpu


def _round_up(a, b):
    return -(-a // b) * b


def _similar_net_kernel(x_ref, p_ref, o_ref):
    # p_ref: (16, 22) packed [ w1s(2) | w2s(16) | w3col(1) | sh1 | sh2 | b3 ]
    p = p_ref[...]
    w1 = p[:, 0:2]                                    # (16, 2)  BN1 scale folded in
    w2_bf = p[:, 2:18].astype(jnp.bfloat16)           # (16, 16) single-pass MXU operand
    w3 = p[:, 18:19]                                  # (16, 1)
    sh1 = p[:, 19:20]                                 # (16, 1)
    sh2 = p[:, 20:21]                                 # (16, 1)
    b3 = p[0:1, 21:22]                                # (1, 1)

    bn = x_ref.shape[0]                               # static: rows batched per step
    for b in range(bn):                               # trace-time unroll
        x = x_ref[b]                                  # (2, TL) positions on lanes

        # Layer 1: Conv1d(2->16) + folded BN + ReLU — VPU broadcast-FMA, f32.
        h1 = jnp.maximum(w1[:, 0:1] * x[0:1] + w1[:, 1:2] * x[1:2] + sh1, 0.0)

        # Layer 2: Conv1d(16->16) + folded BN + ReLU — bf16 operands, f32 acc.
        h2 = jnp.dot(w2_bf, h1.astype(jnp.bfloat16),
                     preferred_element_type=jnp.float32)          # (16, TL)
        h2 = jnp.maximum(h2 + sh2, 0.0)

        # Layer 3: Conv1d(16->1) + bias — VPU mul + XLU sublane-sum, f32.
        o_ref[b] = jnp.sum(w3 * h2, axis=0, keepdims=True) + b3   # (1, TL) lane-dense


def similar_net_pallas(x_ncl, params, tl=32768, max_bn=8):
    """x_ncl: (N, 2, L) float32. Returns (N, 1, L) float32 (inference mode)."""
    w1, g1, be1, m1, v1, w2, g2, be2, m2, v2, w3, b3 = params
    eps = 1e-5

    # Fold BatchNorm (inference) scale into conv weights; keep the shift.
    inv1 = g1 / jnp.sqrt(v1 + eps)                    # (16,)
    sh1 = be1 - m1 * inv1
    inv2 = g2 / jnp.sqrt(v2 + eps)                    # (16,)
    sh2 = be2 - m2 * inv2

    w1s = w1[:, :, 0] * inv1[:, None]                 # (16, 2)
    w2s = w2[:, :, 0] * inv2[:, None]                 # (16, 16)
    w3c = jnp.transpose(w3[:, :, 0])                  # (16, 1)
    hid = w1s.shape[0]

    packed = jnp.concatenate(
        [w1s, w2s, w3c, sh1[:, None], sh2[:, None],
         jnp.broadcast_to(b3.astype(jnp.float32).reshape(1, 1), (hid, 1))],
        axis=1).astype(jnp.float32)                   # (16, 22)

    N, Cin, L = x_ncl.shape

    # Position tile (lane axis): multiple of 128, capped at 32K positions so the
    # (16, TL) f32 temps + double buffers stay well inside every generation's
    # default scoped-VMEM budget (incl. v5e's 16 MiB).
    tl = max(128, _round_up(int(tl), 128))
    tl = min(tl, 32768)
    TL = min(tl, _round_up(L, 128))
    Lp = _round_up(L, TL)
    n_l = Lp // TL

    # Short-L regime: amortize per-grid-step overhead by blocking several batch
    # rows per step; keep Bn*TL <= 32K positions (VMEM) and >= 2 grid steps
    # when possible so both v7x TensorCores get work.
    bn = 1
    if n_l == 1 and N > 1:
        bn = min(max_bn, N, max(1, 32768 // TL))
        while bn > 1 and -(-N // bn) < 2:
            bn //= 2
        bn = max(bn, 1)
    Np = _round_up(N, bn)

    pad_n, pad_l = Np - N, Lp - L
    if pad_n or pad_l:
        # Padded rows/lanes compute harmless garbage and are sliced off below.
        x_ncl = jnp.pad(x_ncl, ((0, pad_n), (0, 0), (0, pad_l)))

    grid = (Np // bn, n_l)

    out = pl.pallas_call(
        _similar_net_kernel,
        out_shape=jax.ShapeDtypeStruct((Np, 1, Lp), jnp.float32),
        grid_spec=pltpu.PrefetchScalarGridSpec(
            num_scalar_prefetch=0,
            grid=grid,
            in_specs=[
                pl.BlockSpec((bn, Cin, TL), lambda n, l: (n, 0, l)),  # x (NCL native)
                pl.BlockSpec(packed.shape, lambda n, l: (0, 0)),      # packed consts
            ],
            out_specs=pl.BlockSpec((bn, 1, TL), lambda n, l: (n, 0, l)),
        ),
        compiler_params=pltpu.CompilerParams(
            dimension_semantics=("parallel", "parallel")),
    )(x_ncl, packed)

    return out[:N, :, :L]                             # (N, 1, L)


def _reference(x_ncl, params):
    """Pure-JAX f32 reference of the same inference-mode forward."""
    w1, g1, be1, m1, v1, w2, g2, be2, m2, v2, w3, b3 = params
    eps = 1e-5
    x = jnp.transpose(x_ncl, (0, 2, 1))                      # (N, L, 2)
    h = x @ jnp.transpose(w1[:, :, 0])                       # (N, L, 16)
    h = (h - m1) / jnp.sqrt(v1 + eps) * g1 + be1
    h = jnp.maximum(h, 0.0)
    h = h @ jnp.transpose(w2[:, :, 0])                       # (N, L, 16)
    h = (h - m2) / jnp.sqrt(v2 + eps) * g2 + be2
    h = jnp.maximum(h, 0.0)
    h = h @ jnp.transpose(w3[:, :, 0]) + b3                  # (N, L, 1)
    return jnp.transpose(h, (0, 2, 1))                       # (N, 1, L)


def _init_params(key):
    ks = jax.random.split(key, 8)
    w1 = jax.random.normal(ks[0], (16, 2, 1), jnp.float32) * 0.5   # Conv1d(2,16,1,bias=False)
    g1 = 1.0 + 0.1 * jax.random.normal(ks[1], (16,), jnp.float32)  # bn1 gamma
    be1 = 0.1 * jax.random.normal(ks[2], (16,), jnp.float32)       # bn1 beta
    m1 = 0.05 * jax.random.normal(ks[3], (16,), jnp.float32)       # bn1 running_mean
    v1 = jnp.abs(1.0 + 0.1 * jax.random.normal(ks[4], (16,), jnp.float32))  # bn1 running_var
    w2 = jax.random.normal(ks[5], (16, 16, 1), jnp.float32) * 0.25  # Conv1d(16,16,1,bias=False)
    g2 = jnp.ones((16,), jnp.float32)
    be2 = jnp.zeros((16,), jnp.float32)
    m2 = jnp.zeros((16,), jnp.float32)
    v2 = jnp.ones((16,), jnp.float32)
    w3 = jax.random.normal(ks[6], (1, 16, 1), jnp.float32) * 0.25   # Conv1d(16,1,1)
    b3 = 0.1 * jax.random.normal(ks[7], (1,), jnp.float32)
    return (w1, g1, be1, m1, v1, w2, g2, be2, m2, v2, w3, b3)


def _check(out, ref):
    # Layer-2 operands are bf16 in the kernel (single MXU pass); the pure-f32
    # reference therefore needs a slightly loose tolerance.
    err = float(jnp.max(jnp.abs(out - ref)))
    assert jnp.allclose(out, ref, atol=5e-2, rtol=5e-2), err


if __name__ == "__main__":
    key = jax.random.PRNGKey(0)
    k_x, k_p, k_x2, k_x3 = jax.random.split(key, 4)
    params = _init_params(k_p)

    # 1) Small shape (L not multiple of 128 -> padded lane tail; N=2, bn=1).
    N, C, L = 2, 2, 300
    x = jax.random.normal(k_x, (N, C, L), jnp.float32)
    out = jax.block_until_ready(similar_net_pallas(x, params))
    assert out.shape == (N, 1, L), out.shape
    _check(out, _reference(x, params))

    # 2) Small tile -> multi-tile grid over the position axis.
    out2 = jax.block_until_ready(similar_net_pallas(x, params, tl=128))
    _check(out2, _reference(x, params))

    # 3) Short-L / larger-N -> batched rows per grid step (bn>1) + batch padding.
    x3 = jax.random.normal(k_x2, (5, C, 1000), jnp.float32)
    out3 = jax.block_until_ready(similar_net_pallas(x3, params))
    assert out3.shape == (5, 1, 1000), out3.shape
    _check(out3, _reference(x3, params))

    # 4) Long-L -> full 32K tile plus a second (padded) tile along L.
    x4 = jax.random.normal(k_x3, (2, C, 40000), jnp.float32)
    out4 = jax.block_until_ready(similar_net_pallas(x4, params))
    assert out4.shape == (2, 1, 40000), out4.shape
    _check(out4, _reference(x4, params))

    print("KERNEL_OK")
</pallas_src>

<mosaic_0001>
module attributes {stable_mosaic.version = 11 : i64} {
  func.func @_similar_net_kernel(%arg0: i32, %arg1: i32, %arg2: memref<1x2x384xf32, #tpu.memory_space<vmem>>, %arg3: memref<16x22xf32, #tpu.memory_space<vmem>>, %arg4: memref<1x1x384xf32, #tpu.memory_space<vmem>>) attributes {dimension_semantics = [#tpu.dimension_semantics<parallel>, #tpu.dimension_semantics<parallel>], iteration_bounds = array<i64: 2, 1>, scalar_prefetch = 0 : i64, scratch_operands = 0 : i64, tpu.core_type = #tpu.core_type<tc>, window_params = [{transform_indices = @transform_0, window_bounds = array<i64: 1, 2, 384>}, {pipeline_mode = #tpu.pipeline_mode<synchronous>, transform_indices = @transform_1, window_bounds = array<i64: 16, 22>}, {transform_indices = @transform_2, window_bounds = array<i64: 1, 1, 384>}]} {
    %c0 = arith.constant 0 : index
    %c0_0 = arith.constant 0 : index
    %0 = vector.load %arg3[%c0, %c0_0] : memref<16x22xf32, #tpu.memory_space<vmem>>, vector<16x22xf32>
    %1 = vector.extract_strided_slice %0 {offsets = [0, 0], sizes = [16, 2], strides = [1, 1]} : vector<16x22xf32> to vector<16x2xf32>
    %2 = vector.extract_strided_slice %0 {offsets = [0, 2], sizes = [16, 16], strides = [1, 1]} : vector<16x22xf32> to vector<16x16xf32>
    %3 = arith.truncf %2 : vector<16x16xf32> to vector<16x16xbf16>
    %4 = vector.extract_strided_slice %0 {offsets = [0, 18], sizes = [16, 1], strides = [1, 1]} : vector<16x22xf32> to vector<16x1xf32>
    %5 = vector.extract_strided_slice %0 {offsets = [0, 19], sizes = [16, 1], strides = [1, 1]} : vector<16x22xf32> to vector<16x1xf32>
    %6 = vector.extract_strided_slice %0 {offsets = [0, 20], sizes = [16, 1], strides = [1, 1]} : vector<16x22xf32> to vector<16x1xf32>
    %7 = vector.extract_strided_slice %0 {offsets = [0, 21], sizes = [1, 1], strides = [1, 1]} : vector<16x22xf32> to vector<1x1xf32>
    %c0_1 = arith.constant 0 : index
    %c0_2 = arith.constant 0 : index
    %c0_3 = arith.constant 0 : index
    %8 = vector.load %arg2[%c0_1, %c0_2, %c0_3] : memref<1x2x384xf32, #tpu.memory_space<vmem>>, vector<1x2x384xf32>
    %9 = vector.shape_cast %8 : vector<1x2x384xf32> to vector<2x384xf32>
    %10 = vector.extract_strided_slice %1 {offsets = [0, 0], sizes = [16, 1], strides = [1, 1]} : vector<16x2xf32> to vector<16x1xf32>
    %11 = vector.extract_strided_slice %9 {offsets = [0, 0], sizes = [1, 384], strides = [1, 1]} : vector<2x384xf32> to vector<1x384xf32>
    %12 = vector.broadcast %10 : vector<16x1xf32> to vector<16x384xf32>
    %13 = vector.broadcast %11 : vector<1x384xf32> to vector<16x384xf32>
    %14 = arith.mulf %12, %13 : vector<16x384xf32>
    %15 = vector.extract_strided_slice %1 {offsets = [0, 1], sizes = [16, 1], strides = [1, 1]} : vector<16x2xf32> to vector<16x1xf32>
    %16 = vector.extract_strided_slice %9 {offsets = [1, 0], sizes = [1, 384], strides = [1, 1]} : vector<2x384xf32> to vector<1x384xf32>
    %17 = vector.broadcast %15 : vector<16x1xf32> to vector<16x384xf32>
    %18 = vector.broadcast %16 : vector<1x384xf32> to vector<16x384xf32>
    %19 = arith.mulf %17, %18 : vector<16x384xf32>
    %20 = arith.addf %14, %19 : vector<16x384xf32>
    %21 = vector.broadcast %5 : vector<16x1xf32> to vector<16x384xf32>
    %22 = arith.addf %20, %21 : vector<16x384xf32>
    %cst = arith.constant 0.000000e+00 : f32
    %23 = vector.broadcast %cst : f32 to vector<16x384xf32>
    %24 = arith.maximumf %22, %23 : vector<16x384xf32>
    %25 = arith.truncf %24 : vector<16x384xf32> to vector<16x384xbf16>
    %cst_4 = arith.constant dense<0.000000e+00> : vector<16x384xf32>
    %26 = tpu.matmul %3, %25, %cst_4 {dimension_numbers = #tpu.dot_dimension_numbers<[1], [0], [0], [1], [0, 0, 1, 1], [], []>} : vector<16x16xbf16>, vector<16x384xbf16>, vector<16x384xf32> -> vector<16x384xf32>
    %27 = vector.broadcast %6 : vector<16x1xf32> to vector<16x384xf32>
    %28 = arith.addf %26, %27 : vector<16x384xf32>
    %cst_5 = arith.constant 0.000000e+00 : f32
    %29 = vector.broadcast %cst_5 : f32 to vector<16x384xf32>
    %30 = arith.maximumf %28, %29 : vector<16x384xf32>
    %31 = vector.broadcast %4 : vector<16x1xf32> to vector<16x384xf32>
    %32 = arith.mulf %31, %30 : vector<16x384xf32>
    %cst_6 = arith.constant dense<0.000000e+00> : vector<384xf32>
    %33 = vector.multi_reduction <add>, %32, %cst_6 [0] : vector<16x384xf32> to vector<384xf32>
    %34 = vector.shape_cast %33 : vector<384xf32> to vector<1x384xf32>
    %35 = vector.broadcast %7 : vector<1x1xf32> to vector<1x384xf32>
    %36 = arith.addf %34, %35 : vector<1x384xf32>
    %c0_7 = arith.constant 0 : index
    %c0_8 = arith.constant 0 : index
    %c0_9 = arith.constant 0 : index
    %37 = vector.load %arg4[%c0_7, %c0_8, %c0_9] : memref<1x1x384xf32, #tpu.memory_space<vmem>>, vector<1x1x384xf32>
    %38 = vector.shape_cast %37 : vector<1x1x384xf32> to vector<1x384xf32>
    %39 = vector.shape_cast %36 : vector<1x384xf32> to vector<1x1x384xf32>
    tpu.vector_store %arg4[%c0_7, %c0_8, %c0_9], %39 {strides = array<i32>} : memref<1x1x384xf32, #tpu.memory_space<vmem>>, vector<1x1x384xf32>,
    return
  }
  func.func @transform_0(%arg0: i32, %arg1: i32) -> (i32, i32, i32) {
    %c0_i32 = arith.constant 0 : i32
    %c0_i32_0 = arith.constant 0 : i32
    return %arg0, %c0_i32, %arg1 : i32, i32, i32
  }
  func.func @transform_1(%arg0: i32, %arg1: i32) -> (i32, i32) {
    %c0_i32 = arith.constant 0 : i32
    %c0_i32_0 = arith.constant 0 : i32
    %c0_i32_1 = arith.constant 0 : i32
    return %c0_i32, %c0_i32_0 : i32, i32
  }
  func.func @transform_2(%arg0: i32, %arg1: i32) -> (i32, i32, i32) {
    %c0_i32 = arith.constant 0 : i32
    %c0_i32_0 = arith.constant 0 : i32
    return %arg0, %c0_i32, %arg1 : i32, i32, i32
  }
}

</mosaic_0001>

<llo_original>
// kernel: tpu_custom_call.1
$region0: #{tpu_custom_call.1}
  #allocation0 [shape = 'u32[]', space=smem, size = 0x4, offset = 0x4, fixed_abs, tag = 'smem constant byte address 0x4 - core index']
  #allocation1 [shape = 'u32[144,128]{1,0:T(1,128)}', space=vmem, size = 0x12000, scoped, tag = 'internal scratch']
  %s0 = inlined_call_operand.hbm [shape: f32[2,2,384], index: 0, kind: input, shape index: {}]
  %s1 = inlined_call_operand.hbm [shape: f32[16,22], index: 1, kind: input, shape index: {}]
  %s2 = inlined_call_operand.hbm [shape: f32[2,1,384], index: 2, kind: output, shape index: {}]
  %s3 = sld [smem:[#allocation0]]
  $region49: #{tpu_custom_call.1} parent=0
    _
  %s5 = ssub.s32 1, %s3
  %s6 = scalar_select 0, %s5, %s3
  $region1: #{tpu_custom_call.1} parent=0
    #allocation2 [shape = 'u8[6144]{0}', space=vmem, size = 0x1800, scoped, tag = 'input window, operand 0']
    #allocation3 [shape = 's32[2]{0}', space=sflag, size = 0x8, scoped, tag = 'scoped memory for tpu_custom_call.1']
    #allocation4 [shape = 's32[2]{0}', space=sflag, size = 0x8, scoped, tag = 'scoped memory for tpu_custom_call.1']
    #allocation5 [shape = 'u8[8192]{0}', space=vmem, size = 0x2000, scoped, tag = 'input window, operand 1, single buffered']
    #allocation6 [shape = 's32[1]{0}', space=sflag, size = 0x4, scoped, tag = 'scoped memory for tpu_custom_call.1']
    #allocation7 [shape = 'u8[3072]{0}', space=vmem, size = 0xc00, scoped, tag = 'output window, operand 0']
    %7 = vsyncpa [#allocation3], 0
    %s8 = scalar_lea.sflag [#allocation3], 1
    %9 = vsyncpa %s8, 0
    %10 = vsyncpa [#allocation6], 0
    %11 = vsyncpa [#allocation4], 0
    %s12 = scalar_lea.sflag [#allocation4], 1
    %13 = vsyncpa %s12, 0
    loop: start=0, step=1, limit=4
    $region2: #{tpu_custom_call.1} parent=1 // loop_pre_header
      _
    $region3: #{tpu_custom_call.1} parent=1 // loop_header
      %s15 = sphi 0, %s19
      %p16 = scmp.ge.s32.totalorder %s15, 4
      %s22 = sphi 0, %s34
      %s23 = sphi 0, %s30
      %s24 = sphi 0, %s22
      %s25 = sphi 0, %s23
      %s26 = sphi 0, %s24
      %s27 = sphi 0, %s25
      %s39 = sphi 0, %s41
      %s42 = sphi 0, %s39
      %s43 = sphi 0, %s42
      %s59 = sphi 0, %s43
      %s63 = sphi 0, %s63
      %s65 = sphi 0, %s63
      %s66 = sphi 0, %s65
      %s80 = sphi 0, %s66
      %s88 = sphi 0, %s90
      %s91 = sphi 0, %s88
      %s92 = sphi 0, %s91
      %s108 = sphi 0, %s92
    $region4: #{tpu_custom_call.1} parent=1 // loop_header_branch
      %18 = sbr.rel (%p16) target = $region8
    $region5: #{tpu_custom_call.1} parent=1 // loop_body
      %s20 = ssub.s32 %s15, 1
      %s21 = ssub.s32 %s15, 2
      %s28 = sadd.s32 1, %s23
      %p29 = scmp.ge.s32.totalorder %s28, 1
      %s30 = scalar_select %p29, 0, %s28
      %s31 = sadd.s32 1, %s22
      %s32 = scalar_select %p29, %s31, %s22
      %p33 = scmp.ge.s32.totalorder %s32, 2
      %s34 = scalar_select %p33, 0, %s32
      %s35 = ssub.s32 %s22, %s34
      %s36 = ssub.s32 %s23, %s30
      %s37 = sor.u32 %s35, %s36
      %p38 = scmp.eq.s32.totalorder %s37, 0
      %s40 = sadd.s32 %s39, 1
      %s41 = scalar_select %p38, %s39, %s40
      %p44 = pneg %p38
      %p45 = scmp.eq.s32.totalorder %s15, 1
      %p46 = por %p44, %p45
      %p47 = scmp.ne.s32.totalorder %s39, %s42
      %p48 = scmp.eq.s32.totalorder %s15, 0
      %p49 = por %p47, %p48
      %p50 = scmp.ne.s32.totalorder %s39, %s42
      %p51 = scmp.eq.s32.totalorder %s20, 1
      %p52 = por %p50, %p51
      %p53 = scmp.ne.s32.totalorder %s42, %s43
      %p54 = scmp.eq.s32.totalorder %s20, 0
      %p55 = por %p53, %p54
      %p56 = scmp.ne.s32.totalorder %s42, %s43
      %p57 = scmp.eq.s32.totalorder %s21, 1
      %p58 = por %p56, %p57
      %p60 = scmp.ne.s32.totalorder %s43, %s59
      %p61 = scmp.eq.s32.totalorder %s21, 0
      %p62 = por %p60, %p61
      %s64 = sadd.s32 %s63, 1
      %p67 = scmp.eq.s32.totalorder %s15, 1
      %p68 = scmp.ne.s32.totalorder %s63, %s65
      %p69 = scmp.eq.s32.totalorder %s15, 0
      %p70 = por %p68, %p69
      %p71 = scmp.ne.s32.totalorder %s63, %s65
      %p72 = scmp.eq.s32.totalorder %s20, 1
      %p73 = por %p71, %p72
      %p74 = scmp.ne.s32.totalorder %s65, %s66
      %p75 = scmp.eq.s32.totalorder %s20, 0
      %p76 = por %p74, %p75
      %p77 = scmp.ne.s32.totalorder %s65, %s66
      %p78 = scmp.eq.s32.totalorder %s21, 1
      %p79 = por %p77, %p78
      %p81 = scmp.ne.s32.totalorder %s66, %s80
      %p82 = scmp.eq.s32.totalorder %s21, 0
      %p83 = por %p81, %p82
      %s84 = ssub.s32 %s22, %s34
      %s85 = ssub.s32 %s23, %s30
      %s86 = sor.u32 %s84, %s85
      %p87 = scmp.eq.s32.totalorder %s86, 0
      %s89 = sadd.s32 %s88, 1
      %s90 = scalar_select %p87, %s88, %s89
      %p93 = pneg %p87
      %p94 = scmp.eq.s32.totalorder %s15, 1
      %p95 = por %p93, %p94
      %p96 = scmp.ne.s32.totalorder %s88, %s91
      %p97 = scmp.eq.s32.totalorder %s15, 0
      %p98 = por %p96, %p97
      %p99 = scmp.ne.s32.totalorder %s88, %s91
      %p100 = scmp.eq.s32.totalorder %s20, 1
      %p101 = por %p99, %p100
      %p102 = scmp.ne.s32.totalorder %s91, %s92
      %p103 = scmp.eq.s32.totalorder %s20, 0
      %p104 = por %p102, %p103
      %p105 = scmp.ne.s32.totalorder %s91, %s92
      %p106 = scmp.eq.s32.totalorder %s21, 1
      %p107 = por %p105, %p106
      %p109 = scmp.ne.s32.totalorder %s92, %s108
      %p110 = scmp.eq.s32.totalorder %s21, 0
      %p111 = por %p109, %p110
      %p112 = scmp.le.s32.totalorder 1, %s15
      %p113 = scmp.lt.s32.totalorder %s15, 3
      %p114 = pnand %p112, %p113
      %p115 = pneg %p114
      // Predicated region
      $region9: #{tpu_custom_call.1} parent=5 // pred_check
        _
      $region10: #{tpu_custom_call.1} parent=5 // pred_check_branch
        %117 = sbr.rel (%p114) target = $region12
      $region11: #{tpu_custom_call.1} parent=5 // pred_region
        %s118 = ssub.s32 %s15, 1
        // Predicated region
        $region13: #{tpu_custom_call.1} parent=11 // pred_check
          %p119 = pneg %p76
        $region14: #{tpu_custom_call.1} parent=11 // pred_check_branch
          %121 = sbr.rel (%p119) target = $region16
        $region15: #{tpu_custom_call.1} parent=11 // pred_region
          %s123 = ssub.s32 256, 256
          %124 = vsyncadd [#allocation6], %s123
          %s125 = sshll.u32 [#allocation5], 4
          %s126 = int_to_ptr.vmem [resolvable:$true] %s125
          %131 = dma.hbm_to_vmem [thread:$0]  %s1, 256, %s126, [#allocation6], 128, 128, 8
        $region16: #{tpu_custom_call.1} parent=11 // pred_fallthru
          _
      $region12: #{tpu_custom_call.1} parent=5 // pred_fallthru
        _
      %p132 = scmp.lt.s32.totalorder %s15, 2
      // Predicated region
      $region17: #{tpu_custom_call.1} parent=5 // pred_check
        %p133 = pneg %p132
      $region18: #{tpu_custom_call.1} parent=5 // pred_check_branch
        %135 = sbr.rel (%p133) target = $region20
      $region19: #{tpu_custom_call.1} parent=5 // pred_region
        // Predicated region
        $region21: #{tpu_custom_call.1} parent=19 // pred_check
          %p136 = pneg %p49
        $region22: #{tpu_custom_call.1} parent=19 // pred_check_branch
          %138 = sbr.rel (%p136) target = $region24
        $region23: #{tpu_custom_call.1} parent=19 // pred_region
          %s139 = sand.u32 %s39, 1
          %s140 = scalar_lea.sflag [#allocation3], %s139
          %s141 = sand.u32 %s39, 1
          %s142 = smul.addr %s141, 6
          %s143 = scalar_lea.vmem [#allocation2], %s142
          %s144 = smul.u32 3, %s23
          %s146 = ssub.s32 96, 96
          %147 = vsyncadd %s140, %s146
          %s148 = smul.addr %s22, 3
          %s149 = sadd.s32 %s144, %s148
          %s150 = smul.addr %s149, 32
          %s151 = scalar_lea.hbm %s0, %s150
          %s153 = sshll.u32 %s143, 4
          %s154 = int_to_ptr.vmem [resolvable:$true] %s153
          %156 = dma.hbm_to_vmem [thread:$0]  %s151, 96, %s154, %s140
        $region24: #{tpu_custom_call.1} parent=19 // pred_fallthru
          _
      $region20: #{tpu_custom_call.1} parent=5 // pred_fallthru
        _
      %p157 = scmp.le.s32.totalorder 1, %s15
      %p158 = scmp.lt.s32.totalorder %s15, 3
      %p159 = pnand %p157, %p158
      %p160 = pneg %p159
      // Predicated region
      $region25: #{tpu_custom_call.1} parent=5 // pred_check
        _
      $region26: #{tpu_custom_call.1} parent=5 // pred_check_branch
        %162 = sbr.rel (%p159) target = $region28
      $region27: #{tpu_custom_call.1} parent=5 // pred_region
        %s163 = ssub.s32 %s15, 1
        %s164 = sand.u32 %s42, 1
        %s165 = scalar_lea.sflag [#allocation3], %s164
        %s166 = sand.u32 %s42, 1
        %s167 = smul.addr %s166, 6
        %s168 = scalar_lea.vmem [#allocation2], %s167
        // Predicated region
        $region29: #{tpu_custom_call.1} parent=27 // pred_check
          %p169 = pneg %p55
        $region30: #{tpu_custom_call.1} parent=27 // pred_check_branch
          %171 = sbr.rel (%p169) target = $region32
        $region31: #{tpu_custom_call.1} parent=27 // pred_region
          %172 = dma.done %s165, 96
        $region32: #{tpu_custom_call.1} parent=27 // pred_fallthru
          _
        // Predicated region
        $region33: #{tpu_custom_call.1} parent=27 // pred_check
          %p173 = pneg %p76
        $region34: #{tpu_custom_call.1} parent=27 // pred_check_branch
          %175 = sbr.rel (%p173) target = $region36
        $region35: #{tpu_custom_call.1} parent=27 // pred_region
          %176 = dma.done [#allocation6], 256
        $region36: #{tpu_custom_call.1} parent=27 // pred_fallthru
          _
        %s177 = sand.u32 %s42, 1
        %s178 = scalar_lea.sflag [#allocation3], %s177
        %s179 = sand.u32 %s42, 1
        %s180 = smul.addr %s179, 6
        %s181 = scalar_lea.vmem [#allocation2], %s180
        %p182 = pneg %p55
        %p183 = pneg %p52
        %p184 = pneg %p76
        %p185 = pneg %p73
        %p186 = pneg %p104
        %p187 = pneg %p101
        %s188 = sand.u32 %s91, 1
        %s189 = scalar_lea.sflag [#allocation4], %s188
        %s190 = sand.u32 %s91, 1
        %s191 = smul.addr %s190, 3
        %s192 = scalar_lea.vmem [#allocation7], %s191
        %s193 = smul.u32 3, %s25
        %s194 = smul.u32 3, %s25
        %v196 = vld [vmem:[#allocation5] sm:$0xff]
        %v197 = vld [vmem:[#allocation5 + $0x8] sm:$0xff]
        %v198 = vpack.c.bf16 %v197, %v196
        %v199 = vld [vmem:[%s168] sm:$0x3f]
        %201 = vset.pattern.permute.xlu0 0
        %202 = vperm.xlu0 %201, %v196
        %v203 = vpop.permute.xlu0 %202
        %206 = vset.pattern.permute.xlu0 0
        %207 = vperm.xlu0 %206, %v197
        %v208 = vpop.permute.xlu0 %207
        %v211 = vlaneseq
        %v212 = vshrl.u32 %v211, 7
        %v213 = vsub.s32 0, %v212
        %v214 = vrot.slane %v199, %v213
        %v215 = vlaneseq
        %v216 = vshrl.u32 %v215, 7
        %v217 = vsub.s32 2, %v216
        %v218 = vrot.slane %v199, %v217
        %v219 = vlaneseq
        %v220 = vshrl.u32 %v219, 7
        %v221 = vsub.s32 4, %v220
        %v222 = vrot.slane %v199, %v221
        %v226 = vlaneseq
        %v227 = vshrl.u32 %v226, 7
        %v228 = vsub.s32 0, %v227
        %v229 = vrot.slane %v214, %v228
        %v230 = vlaneseq
        %v231 = vshrl.u32 %v230, 7
        %v232 = vsub.s32 0, %v231
        %v233 = vrot.slane %v218, %v232
        %v234 = vlaneseq
        %v235 = vshrl.u32 %v234, 7
        %v236 = vsub.s32 0, %v235
        %v237 = vrot.slane %v222, %v236
        %v238 = vmul.f32 %v203, %v229
        %v239 = vmul.f32 %v203, %v233
        %v240 = vmul.f32 %v203, %v237
        %v241 = vmul.f32 %v208, %v229
        %v242 = vmul.f32 %v208, %v233
        %v243 = vmul.f32 %v208, %v237
        %244 = vset.pattern.permute.xlu0 1
        %245 = vperm.xlu0 %244, %v196
        %v246 = vpop.permute.xlu0 %245
        %248 = vset.pattern.permute.xlu0 1
        %249 = vperm.xlu0 %248, %v197
        %v250 = vpop.permute.xlu0 %249
        %v252 = vlaneseq
        %v253 = vshrl.u32 %v252, 7
        %v254 = vsub.s32 1, %v253
        %v255 = vrot.slane %v199, %v254
        %v256 = vlaneseq
        %v257 = vshrl.u32 %v256, 7
        %v258 = vsub.s32 3, %v257
        %v259 = vrot.slane %v199, %v258
        %v260 = vlaneseq
        %v261 = vshrl.u32 %v260, 7
        %v262 = vsub.s32 5, %v261
        %v263 = vrot.slane %v199, %v262
        %v267 = vlaneseq
        %v268 = vshrl.u32 %v267, 7
        %v269 = vsub.s32 1, %v268
        %v270 = vrot.slane %v255, %v269
        %v271 = vlaneseq
        %v272 = vshrl.u32 %v271, 7
        %v273 = vsub.s32 1, %v272
        %v274 = vrot.slane %v259, %v273
        %v275 = vlaneseq
        %v276 = vshrl.u32 %v275, 7
        %v277 = vsub.s32 1, %v276
        %v278 = vrot.slane %v263, %v277
        %v279 = vmul.f32 %v246, %v270
        %v280 = vmul.f32 %v246, %v274
        %v281 = vmul.f32 %v246, %v278
        %v282 = vmul.f32 %v250, %v270
        %v283 = vmul.f32 %v250, %v274
        %v284 = vmul.f32 %v250, %v278
        %v285 = vadd.f32 %v238, %v279
        %v286 = vadd.f32 %v239, %v280
        %v287 = vadd.f32 %v240, %v281
        %v288 = vadd.f32 %v241, %v282
        %v289 = vadd.f32 %v242, %v283
        %v290 = vadd.f32 %v243, %v284
        %291 = vset.pattern.permute.xlu0 19
        %292 = vperm.xlu0 %291, %v196
        %v293 = vpop.permute.xlu0 %292
        %295 = vset.pattern.permute.xlu0 19
        %296 = vperm.xlu0 %295, %v197
        %v297 = vpop.permute.xlu0 %296
        %v299 = vadd.f32 %v285, %v293
        %v300 = vadd.f32 %v286, %v293
        %v301 = vadd.f32 %v287, %v293
        %v302 = vadd.f32 %v288, %v297
        %v303 = vadd.f32 %v289, %v297
        %v304 = vadd.f32 %v290, %v297
        %v305 = vmax.f32 %v299, 0.0
        %v306 = vmax.f32 %v300, 0.0
        %v307 = vmax.f32 %v301, 0.0
        %v308 = vmax.f32 %v302, 0.0
        %v309 = vmax.f32 %v303, 0.0
        %v310 = vmax.f32 %v304, 0.0
        %v311 = vpack.c.bf16 %v308, %v305
        %v312 = vpack.c.bf16 %v309, %v306
        %v313 = vpack.c.bf16 %v310, %v307
        %314 = vset.pattern.permute.xlu0 20
        %315 = vperm.xlu0 %314, %v196
        %v316 = vpop.permute.xlu0 %315
        %318 = vset.pattern.permute.xlu0 20
        %319 = vperm.xlu0 %318, %v197
        %v320 = vpop.permute.xlu0 %319
        %323 = vrot.lane.b32.xlu0 %v198, 126
        %v324 = vpop.permute.xlu0 %323
        %vm325 = vcmask 130048
        %v327 = vsel %vm325, %v324, 0
        %329 = vmatprep.subr.bf16.mxu0 %v312
        %330 = vmatpush1.bf16.msra.mxu0 %v311
        %331 = vmatprep.subr.bf16.mxu0 0
        %332 = vmatpush1.bf16.msra.mxu0 0
        %333 = vmatprep.subr.bf16.mxu0 0
        %334 = vmatpush1.bf16.msra.mxu0 0
        %335 = vmatprep.subr.bf16.mxu0 0
        %336 = vmatpush1.bf16.msra.mxu0 0
        %337 = vmatprep.subr.bf16.mxu0 0
        %338 = vmatpush1.bf16.msra.mxu0 0
        %339 = vmatprep.subr.bf16.mxu0 0
        %340 = vmatpush1.bf16.msra.mxu0 0
        %341 = vmatprep.subr.bf16.mxu0 0
        %342 = vmatpush1.bf16.msra.mxu0 0
        %343 = vmatprep.subr.bf16.mxu0 0
        %344 = vmatpush1.bf16.msra.mxu0 0
        %345 = vmatprep.subr.bf16.mxu0 0
        %346 = vmatpush1.bf16.msra.mxu0 0
        %347 = vmatprep.subr.bf16.mxu0 0
        %348 = vmatpush1.bf16.msra.mxu0 0
        %349 = vmatprep.subr.bf16.mxu0 0
        %350 = vmatpush1.bf16.msra.mxu0 0
        %351 = vmatprep.subr.bf16.mxu0 0
        %352 = vmatpush1.bf16.msra.mxu0 0
        %353 = vmatprep.subr.bf16.mxu0 0
        %354 = vmatpush1.bf16.msra.mxu0 0
        %355 = vmatprep.subr.bf16.mxu0 0
        %356 = vmatpush1.bf16.msra.mxu0 0
        %357 = vmatprep.subr.bf16.mxu0 0
        %358 = vmatpush1.bf16.msra.mxu0 0
        %359 = vmatprep.subr.bf16.mxu0 0
        %360 = vmatpush1.bf16.msra.mxu0 0
        %361 = vmatprep.mubr.bf16.mxu0 0
        %362 = vmatmul.mubr.bf16.gmra.mrb[0].mxu0 %v327
        %v363 = vpop.f32.mrb[0].mxu0
        %v364 = vadd.f32 %v316, %v363
        %v365 = vpop.f32.mrb[0].mxu0
        %v366 = vadd.f32 %v316, %v365
        %v367 = vpop.f32.mrb[0].mxu0
        %v368 = vadd.f32 %v320, %v367
        %v369 = vpop.f32.mrb[0].mxu0
        %v370 = vadd.f32 %v320, %v369
        %371 = vdwg.mxu0
        %372 = vmatprep.subr.bf16.mxu0 0
        %373 = vmatpush1.bf16.msra.mxu0 %v313
        %374 = vmatprep.subr.bf16.mxu0 0
        %375 = vmatpush1.bf16.msra.mxu0 0
        %376 = vmatprep.subr.bf16.mxu0 0
        %377 = vmatpush1.bf16.msra.mxu0 0
        %378 = vmatprep.subr.bf16.mxu0 0
        %379 = vmatpush1.bf16.msra.mxu0 0
        %380 = vmatprep.subr.bf16.mxu0 0
        %381 = vmatpush1.bf16.msra.mxu0 0
        %382 = vmatprep.subr.bf16.mxu0 0
        %383 = vmatpush1.bf16.msra.mxu0 0
        %384 = vmatprep.subr.bf16.mxu0 0
        %385 = vmatpush1.bf16.msra.mxu0 0
        %386 = vmatprep.subr.bf16.mxu0 0
        %387 = vmatpush1.bf16.msra.mxu0 0
        %388 = vmatprep.subr.bf16.mxu0 0
        %389 = vmatpush1.bf16.msra.mxu0 0
        %390 = vmatprep.subr.bf16.mxu0 0
        %391 = vmatpush1.bf16.msra.mxu0 0
        %392 = vmatprep.subr.bf16.mxu0 0
        %393 = vmatpush1.bf16.msra.mxu0 0
        %394 = vmatprep.subr.bf16.mxu0 0
        %395 = vmatpush1.bf16.msra.mxu0 0
        %396 = vmatprep.subr.bf16.mxu0 0
        %397 = vmatpush1.bf16.msra.mxu0 0
        %398 = vmatprep.subr.bf16.mxu0 0
        %399 = vmatpush1.bf16.msra.mxu0 0
        %400 = vmatprep.subr.bf16.mxu0 0
        %401 = vmatpush1.bf16.msra.mxu0 0
        %402 = vmatprep.subr.bf16.mxu0 0
        %403 = vmatpush1.bf16.msra.mxu0 0
        %404 = vmatprep.mubr.bf16.mxu0 0
        %405 = vmatmul.mubr.bf16.gmra.mrb[0].mxu0 %v327
        %v406 = vpop.f32.mrb[0].mxu0
        %v407 = vadd.f32 %v316, %v406
        %v408 = vpop.f32.mrb[0].mxu0
        %v409 = vpop.f32.mrb[0].mxu0
        %v410 = vadd.f32 %v320, %v409
        %v411 = vpop.f32.mrb[0].mxu0
        %412 = vdwg.mxu0
        %v413 = vmax.f32 %v364, 0.0
        %v414 = vmax.f32 %v366, 0.0
        %v415 = vmax.f32 %v407, 0.0
        %v416 = vmax.f32 %v368, 0.0
        %v417 = vmax.f32 %v370, 0.0
        %v418 = vmax.f32 %v410, 0.0
        %419 = vset.pattern.permute.xlu0 18
        %420 = vperm.xlu0 %419, %v196
        %v421 = vpop.permute.xlu0 %420
        %423 = vset.pattern.permute.xlu0 18
        %424 = vperm.xlu0 %423, %v197
        %v425 = vpop.permute.xlu0 %424
        %v427 = vmul.f32 %v421, %v413
        %v428 = vmul.f32 %v421, %v414
        %v429 = vmul.f32 %v421, %v415
        %v430 = vmul.f32 %v425, %v416
        %v431 = vmul.f32 %v425, %v417
        %v432 = vmul.f32 %v425, %v418
        %v433 = vadd.f32 %v427, %v430
        %v434 = vrot.slane %v433, 4
        %v435 = vadd.f32 %v433, %v434
        %v436 = vrot.slane %v435, 2
        %v437 = vadd.f32 %v435, %v436
        %v438 = vrot.slane %v437, 1
        %v439 = vadd.f32 %v437, %v438
        %v440 = vadd.f32 %v428, %v431
        %v441 = vrot.slane %v440, 4
        %v442 = vadd.f32 %v440, %v441
        %v443 = vrot.slane %v442, 2
        %v444 = vadd.f32 %v442, %v443
        %v445 = vrot.slane %v444, 1
        %v446 = vadd.f32 %v444, %v445
        %v447 = vadd.f32 %v429, %v432
        %v448 = vrot.slane %v447, 4
        %v449 = vadd.f32 %v447, %v448
        %v450 = vrot.slane %v449, 2
        %v451 = vadd.f32 %v449, %v450
        %v452 = vrot.slane %v451, 1
        %v453 = vadd.f32 %v451, %v452
        %454 = vset.pattern.permute.xlu0 21
        %455 = vperm.xlu0 %454, %v196
        %v456 = vpop.permute.xlu0 %455
        %v458 = vadd.f32 %v439, %v456
        %v459 = vadd.f32 %v446, %v456
        %v460 = vadd.f32 %v453, %v456
        %v464 = vcombine.low %v458, %v459
        %v466 = vunpack.c.l.s4 1966171168
        %v467 = vunpack.c.0.s8 %v466
        %v468 = vlaneseq
        %v469 = vshrl.u32 %v468, 7
        %v470 = vsub.s32 %v467, %v469
        %v471 = vrot.slane %v464, %v470
        %v473 = vunpack.c.l.s4 1966171168
        %v474 = vunpack.c.0.s8 %v473
        %v475 = vlaneseq
        %v476 = vshrl.u32 %v475, 7
        %v477 = vsub.s32 %v474, %v476
        %v478 = vrot.slane %v460, %v477
        %v479 = vcombine.low %v471, %v478
        %v481 = vunpack.c.l.s4 1966171168
        %v482 = vunpack.c.0.s8 %v481
        %v483 = vlaneseq
        %v484 = vshrl.u32 %v483, 7
        %v485 = vsub.s32 %v482, %v484
        %v486 = vrot.slane %v479, %v485
        %v488 = vlaneseq
        %vm489 = vcmp.ge.s32.totalorder %v488, 0
        %vm490 = vcmp.lt.s32.totalorder %v488, 384
        %vm491 = vmand %vm489, %vm490
        %492 = vst.msk [vmem:[%s192] sm:$0x7] %vm491, %v486
        %s493 = sand.u32 %s91, 1
        %s494 = scalar_lea.sflag [#allocation4], %s493
        %s495 = sand.u32 %s91, 1
        %s496 = smul.addr %s495, 3
        %s497 = scalar_lea.vmem [#allocation7], %s496
        // Predicated region
        $region37: #{tpu_custom_call.1} parent=27 // pred_check
          %p498 = pneg %p101
        $region38: #{tpu_custom_call.1} parent=27 // pred_check_branch
          %500 = sbr.rel (%p498) target = $region40
        $region39: #{tpu_custom_call.1} parent=27 // pred_region
          %s501 = smul.u32 3, %s25
          %s503 = ssub.s32 48, 48
          %504 = vsyncadd %s494, %s503
          %s505 = smul.addr %s24, 3
          %s506 = sadd.s32 %s501, %s505
          %s507 = smul.addr %s506, 16
          %s508 = scalar_lea.hbm %s2, %s507
          %s510 = sshll.u32 %s497, 4
          %s511 = int_to_ptr.vmem [resolvable:$true] %s510
          %513 = dma.vmem_to_hbm [thread:$0]  %s511, 48, %s508, %s494
        $region40: #{tpu_custom_call.1} parent=27 // pred_fallthru
          _
      $region28: #{tpu_custom_call.1} parent=5 // pred_fallthru
        _
      %p514 = scmp.le.s32.totalorder 2, %s15
      // Predicated region
      $region41: #{tpu_custom_call.1} parent=5 // pred_check
        %p515 = pneg %p514
      $region42: #{tpu_custom_call.1} parent=5 // pred_check_branch
        %517 = sbr.rel (%p515) target = $region44
      $region43: #{tpu_custom_call.1} parent=5 // pred_region
        %s518 = ssub.s32 %s15, 2
        // Predicated region
        $region45: #{tpu_custom_call.1} parent=43 // pred_check
          %p519 = pneg %p107
        $region46: #{tpu_custom_call.1} parent=43 // pred_check_branch
          %521 = sbr.rel (%p519) target = $region48
        $region47: #{tpu_custom_call.1} parent=43 // pred_region
          %s522 = sand.u32 %s92, 1
          %s523 = scalar_lea.sflag [#allocation4], %s522
          %s524 = sand.u32 %s92, 1
          %s525 = smul.addr %s524, 3
          %s526 = scalar_lea.vmem [#allocation7], %s525
          %527 = dma.done %s523, 48
        $region48: #{tpu_custom_call.1} parent=43 // pred_fallthru
          _
      $region44: #{tpu_custom_call.1} parent=5 // pred_fallthru
        _
    $region6: #{tpu_custom_call.1} parent=1 // loop_footer
      %s19 = sadd.s32 1, %s15
    $region7: #{tpu_custom_call.1} parent=1 // loop_footer_branch
      %14 = sbr.rel target = $region3
    $region8: #{tpu_custom_call.1} parent=1 // loop_exit
      _
    %528 = vsyncpa [#allocation3], 1
    %s529 = scalar_lea.sflag [#allocation3], 1
    %530 = vsyncpa %s529, 1
    %531 = vsyncpa [#allocation6], 1
    %532 = vsyncpa [#allocation4], 1
    %s533 = scalar_lea.sflag [#allocation4], 1
    %534 = vsyncpa %s533, 1

</llo_original>
